<compile_context>
chip_gen: v7x
topology: tpu7x:2x2x1
jax: 0.10.0
libtpu: 0.0.40
codegen_flags: <defaults>
</compile_context>

<pallas_src>
import jax
import jax.numpy as jnp
from jax.experimental import pallas as pl
from jax.experimental.pallas import tpu as pltpu

_LANES = 128  # vreg lane width


def _min_sublanes(dtype):
    # Minimum second-to-last tile dim: 8 for f32, 16 for bf16, 32 for int8/fp8.
    return max(8, 32 // jnp.dtype(dtype).itemsize)


def _round_up(a, m):
    return ((a + m - 1) // m) * m


def linear_kernel(wb_ref, x_ref, o_ref):
    # wb_ref: (2,) f32 SMEM = [w, b]; x_ref / o_ref: (tile_rows, 128) VMEM tiles.
    # Scalar reads hoisted to the top; pure VPU fused multiply-add, no MXU.
    w = wb_ref[0]
    b = wb_ref[1]
    y = x_ref[...].astype(jnp.float32) * w + b
    o_ref[...] = y.astype(o_ref.dtype)


def _run_slab(x_slab, wb, *, block_rows):
    """Elementwise x*w+b over a lane-dense (n_rows, 128) slab."""
    n_rows, lanes = x_slab.shape
    assert lanes == _LANES
    dtype = x_slab.dtype
    sub = _min_sublanes(dtype)

    if n_rows <= sub:
        # Block equals the full array dims (always a legal TPU block).
        tile_rows = n_rows
    else:
        # Aim for >= 4 grid steps (>= 2 per TensorCore on v7x) so the DMA pipeline
        # overlaps and both cores get work, but never exceed block_rows (VMEM cap).
        target = pl.cdiv(n_rows, 4)
        tile_rows = max(sub, min(block_rows, _round_up(target, sub)))
        tile_rows = min(tile_rows, _round_up(n_rows, sub))

    grid = (pl.cdiv(n_rows, tile_rows),)
    n_elems = n_rows * lanes
    itemsize = jnp.dtype(dtype).itemsize
    cost = pl.CostEstimate(
        flops=2 * n_elems,
        transcendentals=0,
        bytes_accessed=2 * n_elems * itemsize,
    )

    return pl.pallas_call(
        linear_kernel,
        out_shape=jax.ShapeDtypeStruct((n_rows, lanes), dtype),
        grid=grid,
        in_specs=[
            # Packed (w, b) scalars live in SMEM: whole array, no pipelining/DMA tile.
            pl.BlockSpec(memory_space=pltpu.MemorySpace.SMEM),
            # Lane-dense batch tiles (unmasked vst except possibly the edge block).
            pl.BlockSpec((tile_rows, lanes), lambda i: (i, 0)),
        ],
        out_specs=pl.BlockSpec((tile_rows, lanes), lambda i: (i, 0)),
        compiler_params=pltpu.CompilerParams(
            # Batch axis is independent -> shard across TensorCores on v7x megacore.
            dimension_semantics=("parallel",),
        ),
        cost_estimate=cost,
    )(wb, x_slab)


def linear_forward(x, w, b, *, block_rows=2048):
    """nn.Linear(1, 1) forward. x: (B, 1), w: (1, 1), b: (1,) -> (B, 1)."""
    B, f_in = x.shape
    assert f_in == 1 and w.shape == (1, 1) and b.shape == (1,)
    dtype = x.dtype

    # w and b packed into a single (2,) f32 SMEM vector; kernel casts as needed.
    wb = jnp.concatenate([w.reshape(-1), b.reshape(-1)]).astype(jnp.float32)

    x_flat = x.reshape(-1)
    main = (B // _LANES) * _LANES

    if main == B:
        # Aligned fast path: free reshape, no pad, no output slice.
        y = _run_slab(x_flat.reshape(B // _LANES, _LANES), wb, block_rows=block_rows)
        return y.reshape(B, 1)

    if main == 0:
        # Tiny batch (< 128): pad to one minimal (sub, 128) slab (negligible traffic).
        sub = _min_sublanes(dtype)
        pad_to = sub * _LANES
        x_slab = jnp.pad(x_flat, (0, pad_to - B)).reshape(sub, _LANES)
        y = _run_slab(x_slab, wb, block_rows=block_rows)
        return y.reshape(pad_to, 1)[:B, :]

    # Unaligned B: kernel over the 128-aligned prefix + tiny plain-XLA tail epilogue.
    y_main = _run_slab(
        x_flat[:main].reshape(main // _LANES, _LANES), wb, block_rows=block_rows
    )
    tail = x_flat[main:]
    y_tail = (tail.astype(jnp.float32) * wb[0] + wb[1]).astype(dtype)
    return jnp.concatenate([y_main.reshape(-1), y_tail]).reshape(B, 1)


if __name__ == "__main__":
    key = jax.random.PRNGKey(0)
    kx, kw, kb = jax.random.split(key, 3)

    # Deterministic params (same style as PyTorch init with fan_in=1).
    w = jax.random.uniform(kw, (1, 1), minval=-1.0, maxval=1.0, dtype=jnp.float32)
    b = jax.random.uniform(kb, (1,), minval=-1.0, maxval=1.0, dtype=jnp.float32)

    # Small shape implied by nn.Linear(1, 1): x is (batch, 1).
    B = 8
    x = jax.random.normal(kx, (B, 1), dtype=jnp.float32)
    y = jax.block_until_ready(linear_forward(x, w, b))
    y_ref = x @ w.T + b
    assert y.shape == (B, 1)
    assert jnp.allclose(y, y_ref, atol=1e-6, rtol=1e-6)

    # Aligned multi-tile fast path (no pad / no slice, grid >= 2).
    B2 = 2048
    x2 = jax.random.normal(kx, (B2, 1), dtype=jnp.float32)
    y2 = jax.block_until_ready(linear_forward(x2, w, b))
    assert y2.shape == (B2, 1)
    assert jnp.allclose(y2, x2 @ w.T + b, atol=1e-6, rtol=1e-6)

    # Unaligned batch: kernel on aligned prefix + XLA tail epilogue.
    B3 = 300
    x3 = jax.random.normal(kx, (B3, 1), dtype=jnp.float32)
    y3 = jax.block_until_ready(linear_forward(x3, w, b))
    assert y3.shape == (B3, 1)
    assert jnp.allclose(y3, x3 @ w.T + b, atol=1e-6, rtol=1e-6)

    print("KERNEL_OK")
</pallas_src>

<mosaic_0001>
module attributes {stable_mosaic.version = 11 : i64} {
  func.func @linear_kernel(%arg0: i32, %arg1: memref<2xf32, #tpu.memory_space<smem>>, %arg2: memref<8x128xf32, #tpu.memory_space<vmem>>, %arg3: memref<8x128xf32, #tpu.memory_space<vmem>>) attributes {dimension_semantics = [#tpu.dimension_semantics<parallel>], iteration_bounds = array<i64: 1>, scalar_prefetch = 0 : i64, scratch_operands = 0 : i64, tpu.core_type = #tpu.core_type<tc>, window_params = [{transform_indices = @transform_0, window_bounds = array<i64: 2>}, {transform_indices = @transform_1, window_bounds = array<i64: 8, 128>}, {transform_indices = @transform_2, window_bounds = array<i64: 8, 128>}]} {
    %c0 = arith.constant 0 : index
    %0 = memref.load %arg1[%c0] : memref<2xf32, #tpu.memory_space<smem>>
    %c1 = arith.constant 1 : index
    %1 = memref.load %arg1[%c1] : memref<2xf32, #tpu.memory_space<smem>>
    %c0_0 = arith.constant 0 : index
    %c0_1 = arith.constant 0 : index
    %2 = vector.load %arg2[%c0_0, %c0_1] : memref<8x128xf32, #tpu.memory_space<vmem>>, vector<8x128xf32>
    %3 = vector.broadcast %0 : f32 to vector<8x128xf32>
    %4 = arith.mulf %2, %3 : vector<8x128xf32>
    %5 = vector.broadcast %1 : f32 to vector<8x128xf32>
    %6 = arith.addf %4, %5 : vector<8x128xf32>
    %c0_2 = arith.constant 0 : index
    %c0_3 = arith.constant 0 : index
    %7 = vector.load %arg3[%c0_2, %c0_3] : memref<8x128xf32, #tpu.memory_space<vmem>>, vector<8x128xf32>
    tpu.vector_store %arg3[%c0_2, %c0_3], %6 {strides = array<i32>} : memref<8x128xf32, #tpu.memory_space<vmem>>, vector<8x128xf32>,
    return
  }
  func.func @transform_0(%arg0: i32) -> i32 {
    %c0_i32 = arith.constant 0 : i32
    %c0_i32_0 = arith.constant 0 : i32
    return %c0_i32 : i32
  }
  func.func @transform_1(%arg0: i32) -> (i32, i32) {
    %c0_i32 = arith.constant 0 : i32
    %c0_i32_0 = arith.constant 0 : i32
    return %arg0, %c0_i32 : i32, i32
  }
  func.func @transform_2(%arg0: i32) -> (i32, i32) {
    %c0_i32 = arith.constant 0 : i32
    %c0_i32_0 = arith.constant 0 : i32
    return %arg0, %c0_i32 : i32, i32
  }
}

</mosaic_0001>

<llo_original>
// kernel: tpu_custom_call.1
$region0: #{tpu_custom_call.1}
  #allocation0 [shape = 'u32[]', space=smem, size = 0x4, offset = 0x4, fixed_abs, tag = 'smem constant byte address 0x4 - core index']
  #allocation1 [shape = 'u32[144,128]{1,0:T(1,128)}', space=vmem, size = 0x12000, scoped, tag = 'internal scratch']
  %s0 = inlined_call_operand.hbm [shape: f32[2], index: 0, kind: input, shape index: {}]
  %s1 = inlined_call_operand.hbm [shape: f32[8,128], index: 1, kind: input, shape index: {}]
  %s2 = inlined_call_operand.hbm [shape: f32[8,128], index: 2, kind: output, shape index: {}]
  %s3 = sld [smem:[#allocation0]]
  $region26: #{tpu_custom_call.1} parent=0
    _
  %s5 = ssub.s32 1, %s3
  %s6 = scalar_select 0, %s5, %s3
  $region1: #{tpu_custom_call.1} parent=0
    #allocation2 [shape = 'u8[512]{0}', space=smem, size = 0x200, scoped, tag = 'input window, operand 0, single buffered']
    #allocation3 [shape = 's32[1]{0}', space=sflag, size = 0x4, scoped, tag = 'scoped memory for tpu_custom_call.1']
    #allocation4 [shape = 's32[1]{0}', space=sflag, size = 0x4, scoped, tag = 'scoped memory for tpu_custom_call.1']
    #allocation5 [shape = 's32[1]{0}', space=sflag, size = 0x4, scoped, tag = 'scoped memory for tpu_custom_call.1']
    #allocation6 [shape = 'u8[4096]{0}', space=vmem, size = 0x1000, scoped, tag = 'input window, operand 1, single buffered']
    #allocation7 [shape = 'u8[4096]{0}', space=vmem, size = 0x1000, scoped, tag = 'output window, operand 0, single buffered']
    %7 = vsyncpa [#allocation5], 0
    %8 = vsyncpa [#allocation3], 0
    %9 = vsyncpa [#allocation4], 0
    // Predicated region
    $region2: #{tpu_custom_call.1} parent=1 // pred_check
      _
    $region3: #{tpu_custom_call.1} parent=1 // pred_check_branch
      %11 = sbr.rel (0) target = $region5
    $region4: #{tpu_custom_call.1} parent=1 // pred_region
      %s13 = ssub.s32 16, 16
      %14 = vsyncadd [#allocation5], %s13
      %17 = dma.hbm_to_smem %s0, 16, [#allocation2], [#allocation5]
    $region5: #{tpu_custom_call.1} parent=1 // pred_fallthru
      _
    // Predicated region
    $region6: #{tpu_custom_call.1} parent=1 // pred_check
      _
    $region7: #{tpu_custom_call.1} parent=1 // pred_check_branch
      %19 = sbr.rel (0) target = $region9
    $region8: #{tpu_custom_call.1} parent=1 // pred_region
      %s21 = ssub.s32 128, 128
      %22 = vsyncadd [#allocation3], %s21
      %s24 = sshll.u32 [#allocation6], 4
      %s25 = int_to_ptr.vmem [resolvable:$true] %s24
      %27 = dma.hbm_to_vmem [thread:$0]  %s1, 128, %s25, [#allocation3]
    $region9: #{tpu_custom_call.1} parent=1 // pred_fallthru
      _
    // Predicated region
    $region10: #{tpu_custom_call.1} parent=1 // pred_check
      _
    $region11: #{tpu_custom_call.1} parent=1 // pred_check_branch
      %29 = sbr.rel (0) target = $region13
    $region12: #{tpu_custom_call.1} parent=1 // pred_region
      %30 = dma.done [#allocation5], 16
    $region13: #{tpu_custom_call.1} parent=1 // pred_fallthru
      _
    // Predicated region
    $region14: #{tpu_custom_call.1} parent=1 // pred_check
      _
    $region15: #{tpu_custom_call.1} parent=1 // pred_check_branch
      %32 = sbr.rel (0) target = $region17
    $region16: #{tpu_custom_call.1} parent=1 // pred_region
      %33 = dma.done [#allocation3], 128
    $region17: #{tpu_custom_call.1} parent=1 // pred_fallthru
      _
    %34 = sfence
    %s35 = sld [smem:[#allocation2]]
    %s36 = sld [smem:[#allocation2 + $0x1]]
    %v37 = vld [vmem:[#allocation6] sm:$0xff]
    %v38 = vstv %s35
    %v39 = vmul.f32 %v37, %v38
    %v40 = vstv %s36
    %v41 = vadd.f32 %v39, %v40
    %42 = vst [vmem:[#allocation7] sm:$0xff] %v41
    // Predicated region
    $region18: #{tpu_custom_call.1} parent=1 // pred_check
      _
    $region19: #{tpu_custom_call.1} parent=1 // pred_check_branch
      %44 = sbr.rel (0) target = $region21
    $region20: #{tpu_custom_call.1} parent=1 // pred_region
      %s46 = ssub.s32 128, 128
      %47 = vsyncadd [#allocation4], %s46
      %s49 = sshll.u32 [#allocation7], 4
      %s50 = int_to_ptr.vmem [resolvable:$true] %s49
      %52 = dma.vmem_to_hbm [thread:$0]  %s50, 128, %s2, [#allocation4]
    $region21: #{tpu_custom_call.1} parent=1 // pred_fallthru
      _
    // Predicated region
    $region22: #{tpu_custom_call.1} parent=1 // pred_check
      _
    $region23: #{tpu_custom_call.1} parent=1 // pred_check_branch
      %54 = sbr.rel (0) target = $region25
    $region24: #{tpu_custom_call.1} parent=1 // pred_region
      %55 = dma.done [#allocation4], 128
    $region25: #{tpu_custom_call.1} parent=1 // pred_fallthru
      _
    %56 = vsyncpa [#allocation3], 1
    %57 = vsyncpa [#allocation4], 1
    %58 = vsyncpa [#allocation5], 1

</llo_original>
